<compile_context>
chip_gen: v7x
topology: tpu7x:2x2x1
jax: 0.10.0
libtpu: 0.0.40
codegen_flags: <defaults>
</compile_context>

<pallas_src>
import functools

import jax
import jax.numpy as jnp
import numpy as np
from jax.experimental import pallas as pl
from jax.experimental.pallas import tpu as pltpu


# --------------------------------------------------------------------------
# Kernel body
# --------------------------------------------------------------------------
def _rope_kernel(pos_ref, inv_ts_ref, x_ref, o_ref, *, compute_dtype):
    # pos_ref:    (T_TILE, 1)    f32 positions for this tile
    # inv_ts_ref: (1, D)         f32, [-1/ts, +1/ts] (sign folded into 1st half)
    # x_ref:      (T_TILE, H, D) input dtype
    # o_ref:      (T_TILE, H, D) output dtype
    D = inv_ts_ref.shape[-1]
    half = D // 2

    # Angles always in f32 (positions can be large); trig computed lane-dense
    # once at (T_TILE, D) and shared across all heads.  Because
    # sin(-x) = -sin(x), cos(-x) = cos(x), the negated first-half inverse
    # timescales give directly:
    #   cos_full   = [cos, cos]
    #   sin_signed = [-sin, sin]
    ang = pos_ref[...] * inv_ts_ref[...]                 # (T_TILE, D) f32
    sin_signed = jnp.sin(ang).astype(compute_dtype)
    cos_full = jnp.cos(ang).astype(compute_dtype)

    x = x_ref[...].astype(compute_dtype)                 # no-op cast on lowp path
    # rotate-half: swap the two D/2 halves along the lane axis (XLU slot).
    x_swap = pltpu.roll(x, shift=half, axis=x.ndim - 1)

    out = x * cos_full[:, None, :] + x_swap * sin_signed[:, None, :]
    o_ref[...] = out.astype(o_ref.dtype)                 # lane-dense full-D store


# --------------------------------------------------------------------------
# VMEM accounting / tile selection
# --------------------------------------------------------------------------
def _round_up(x, m):
    return ((x + m - 1) // m) * m


def _sublane_tile(dtype):
    # sublane packing: 8 for 32-bit, 16 for bf16, 32 for 8-bit dtypes
    return 8 * max(1, 4 // jnp.dtype(dtype).itemsize)


def _tpu_info():
    try:
        return pltpu.get_tpu_info()
    except Exception:  # interpret mode / non-TPU backend
        return None


def _device_generation():
    try:
        kind = jax.devices()[0].device_kind.lower()
        for g in (7, 6, 5, 4):
            if f"v{g}" in kind:
                return g
    except Exception:
        pass
    return 0


def _vmem_bytes_per_row(H, D, in_dtype, out_dtype, compute_dtype):
    """Layout-padded VMEM bytes consumed per T row of the block."""
    d_pad = _round_up(D, 128)

    def padded(dt):
        return _round_up(H, _sublane_tile(dt)) * d_pad * jnp.dtype(dt).itemsize

    in_row = 2 * padded(in_dtype)          # double-buffered input block
    out_row = 2 * padded(out_dtype)        # double-buffered output block
    tmp_row = 3 * padded(compute_dtype)    # x, rolled x, blended out temporaries
    trig_row = 2 * d_pad * 4               # sin/cos at (T_TILE, D) f32
    return in_row + out_row + tmp_row + trig_row


def _choose_t_tile(B, T, H, D, in_dtype, out_dtype, compute_dtype,
                   budget_bytes, min_grid_steps):
    """Largest T tile that divides T (multiple of 8 where possible), fits the
    VMEM budget including temporaries, and — when requested — leaves enough
    grid steps for both TensorCores on megacore parts."""
    row_bytes = _vmem_bytes_per_row(H, D, in_dtype, out_dtype, compute_dtype)
    max_rows = max(1, budget_bytes // max(row_bytes, 1))

    cands = [t for t in range(8, T + 1, 8) if T % t == 0]
    if T not in cands:
        cands.append(T)
    cands.sort()

    fitting = [t for t in cands if t <= max_rows]
    t_tile = max(fitting) if fitting else min(cands)

    if min_grid_steps > 1 and fitting:
        good = [t for t in fitting if B * (T // t) >= min_grid_steps]
        if good:
            t_tile = max(good)
    return t_tile


# --------------------------------------------------------------------------
# Public wrapper
# --------------------------------------------------------------------------
def rotary_embedding(inputs, position, *, min_timescale=1, max_timescale=10000,
                     out_dtype=None):
    """Applies RoPE. inputs: [B, T, H, D], position: [B, T] (int or float).

    out_dtype=None returns the input dtype (bf16 in -> bf16 out); pass
    jnp.float32 to reproduce the PyTorch module's default compute_dtype.
    """
    B, T, H, D = inputs.shape
    if D % 2 != 0:
        raise ValueError("Embedding dim must be even for RoPE.")
    half = D // 2
    out_dtype = inputs.dtype if out_dtype is None else jnp.dtype(out_dtype)

    # "Buffer" setup from the module __init__, done on the host:
    # signed inverse timescales of shape (1, D): [-1/ts, +1/ts].
    fraction = 2.0 * jnp.arange(0, half, dtype=jnp.float32) / float(D)
    timescale = (float(min_timescale)
                 * (float(max_timescale) / float(min_timescale)) ** fraction)
    inv_ts = (1.0 / timescale).astype(jnp.float32)
    inv_ts_signed = jnp.concatenate([-inv_ts, inv_ts]).reshape(1, D)

    # Positions broadcast over heads / head_dim. f32 is exact for positions < 2**24.
    pos = position.astype(jnp.float32).reshape(B, T, 1)

    # Generation-aware compute dtype: bf16 blend on v6e/v7x (bf16 VALU) when
    # the I/O is bf16; f32 everywhere else (incl. v5e and unknown backends).
    gen = _device_generation()
    lowp_ok = (gen >= 6 and inputs.dtype == jnp.bfloat16
               and out_dtype == jnp.bfloat16)
    compute_dtype = inputs.dtype if lowp_ok else jnp.float32

    # Generation-aware VMEM budget.
    info = _tpu_info()
    vmem_cap = getattr(info, "vmem_capacity_bytes", None) if info else None
    if not vmem_cap:
        vmem_cap = 64 << 20          # conservative fallback (v7x-sized)
    block_budget = int(vmem_cap * 0.60)          # blocks + in-kernel temporaries
    vmem_limit = min(int(vmem_cap * 0.90), 128 << 20)

    # v7x has 2 TensorCores per chip: keep enough grid steps for megacore.
    min_grid_steps = 8 if gen >= 7 else 1

    t_tile = _choose_t_tile(B, T, H, D, inputs.dtype, out_dtype, compute_dtype,
                            block_budget, min_grid_steps)
    grid = (B, T // t_tile)

    in_isz = jnp.dtype(inputs.dtype).itemsize
    out_isz = jnp.dtype(out_dtype).itemsize
    cost = pl.CostEstimate(
        flops=int(3 * B * T * H * D + B * T * D),
        transcendentals=int(2 * B * T * D),
        bytes_accessed=int(B * T * H * D * (in_isz + out_isz) + B * T * 4 + D * 4),
    )

    kernel = functools.partial(_rope_kernel, compute_dtype=compute_dtype)

    return pl.pallas_call(
        kernel,
        out_shape=jax.ShapeDtypeStruct((B, T, H, D), out_dtype),
        grid_spec=pl.GridSpec(
            grid=grid,
            in_specs=[
                pl.BlockSpec((None, t_tile, 1), lambda b, t: (b, t, 0)),        # positions
                pl.BlockSpec((1, D), lambda b, t: (0, 0)),                       # inv timescales
                pl.BlockSpec((None, t_tile, H, D), lambda b, t: (b, t, 0, 0)),   # inputs
            ],
            out_specs=pl.BlockSpec((None, t_tile, H, D), lambda b, t: (b, t, 0, 0)),
        ),
        compiler_params=pltpu.CompilerParams(
            dimension_semantics=("parallel", "parallel"),
            vmem_limit_bytes=vmem_limit,
        ),
        cost_estimate=cost,
    )(pos, inv_ts_signed, inputs)


# --------------------------------------------------------------------------
# Reference + smoke test
# --------------------------------------------------------------------------
def _rope_reference(inputs, position, *, min_timescale=1, max_timescale=10000):
    """Pure-numpy reference mirroring the PyTorch forward."""
    inputs = np.asarray(inputs, dtype=np.float32)
    position = np.asarray(position, dtype=np.float32)
    B, T, H, D = inputs.shape
    half = D // 2
    fraction = 2.0 * np.arange(0, half, dtype=np.float32) / float(D)
    timescale = (min_timescale *
                 (max_timescale / min_timescale) ** fraction).astype(np.float32)
    pos = position[..., None, None]                   # (B, T, 1, 1)
    sinusoid = pos / timescale                        # (B, T, 1, half)
    sin, cos = np.sin(sinusoid), np.cos(sinusoid)
    first, second = inputs[..., :half], inputs[..., half:]
    return np.concatenate([first * cos - second * sin,
                           second * cos + first * sin], axis=-1)


if __name__ == "__main__":
    key = jax.random.PRNGKey(0)
    B, T, H, D = 2, 8, 4, 32
    k1, _ = jax.random.split(key)
    x = jax.random.normal(k1, (B, T, H, D), dtype=jnp.float32)
    position = jnp.broadcast_to(jnp.arange(T, dtype=jnp.int32)[None, :], (B, T))

    out = rotary_embedding(x, position)
    out = jax.block_until_ready(out)

    ref = _rope_reference(np.array(x), np.array(position))
    np.testing.assert_allclose(np.array(out), ref, rtol=1e-5, atol=1e-5)
    print("KERNEL_OK")
</pallas_src>

<mosaic_0001>
module attributes {stable_mosaic.version = 11 : i64} {
  func.func @_rope_kernel(%arg0: i32, %arg1: i32, %arg2: memref<1x8x1xf32, #tpu.memory_space<vmem>>, %arg3: memref<1x32xf32, #tpu.memory_space<vmem>>, %arg4: memref<1x8x4x32xf32, #tpu.memory_space<vmem>>, %arg5: memref<1x8x4x32xf32, #tpu.memory_space<vmem>>) attributes {dimension_semantics = [#tpu.dimension_semantics<parallel>, #tpu.dimension_semantics<parallel>], iteration_bounds = array<i64: 2, 1>, scalar_prefetch = 0 : i64, scratch_operands = 0 : i64, tpu.core_type = #tpu.core_type<tc>, window_params = [{transform_indices = @transform_0, window_bounds = array<i64: 1, 8, 1>}, {pipeline_mode = #tpu.pipeline_mode<synchronous>, transform_indices = @transform_1, window_bounds = array<i64: 1, 32>}, {transform_indices = @transform_2, window_bounds = array<i64: 1, 8, 4, 32>}, {transform_indices = @transform_3, window_bounds = array<i64: 1, 8, 4, 32>}]} {
    %c0 = arith.constant 0 : index
    %c0_0 = arith.constant 0 : index
    %c0_1 = arith.constant 0 : index
    %0 = vector.load %arg2[%c0, %c0_0, %c0_1] : memref<1x8x1xf32, #tpu.memory_space<vmem>>, vector<1x8x1xf32>
    %1 = vector.shape_cast %0 : vector<1x8x1xf32> to vector<8x1xf32>
    %c0_2 = arith.constant 0 : index
    %c0_3 = arith.constant 0 : index
    %2 = vector.load %arg3[%c0_2, %c0_3] : memref<1x32xf32, #tpu.memory_space<vmem>>, vector<1x32xf32>
    %3 = vector.broadcast %1 : vector<8x1xf32> to vector<8x32xf32>
    %4 = vector.broadcast %2 : vector<1x32xf32> to vector<8x32xf32>
    %5 = arith.mulf %3, %4 : vector<8x32xf32>
    %6 = math.sin %5 : vector<8x32xf32>
    %7 = math.cos %5 : vector<8x32xf32>
    %c0_4 = arith.constant 0 : index
    %c0_5 = arith.constant 0 : index
    %c0_6 = arith.constant 0 : index
    %c0_7 = arith.constant 0 : index
    %8 = vector.load %arg4[%c0_4, %c0_5, %c0_6, %c0_7] : memref<1x8x4x32xf32, #tpu.memory_space<vmem>>, vector<1x8x4x32xf32>
    %9 = vector.shape_cast %8 : vector<1x8x4x32xf32> to vector<8x4x32xf32>
    %c16_i32 = arith.constant 16 : i32
    %10 = tpu.dynamic_rotate %9 by %c16_i32 dim 2 : vector<8x4x32xf32>, i32 -> vector<8x4x32xf32>
    %11 = vector.shape_cast %7 : vector<8x32xf32> to vector<8x1x32xf32>
    %12 = vector.broadcast %11 : vector<8x1x32xf32> to vector<8x4x32xf32>
    %13 = arith.mulf %9, %12 : vector<8x4x32xf32>
    %14 = vector.shape_cast %6 : vector<8x32xf32> to vector<8x1x32xf32>
    %15 = vector.broadcast %14 : vector<8x1x32xf32> to vector<8x4x32xf32>
    %16 = arith.mulf %10, %15 : vector<8x4x32xf32>
    %17 = arith.addf %13, %16 : vector<8x4x32xf32>
    %c0_8 = arith.constant 0 : index
    %c0_9 = arith.constant 0 : index
    %c0_10 = arith.constant 0 : index
    %c0_11 = arith.constant 0 : index
    %18 = vector.load %arg5[%c0_8, %c0_9, %c0_10, %c0_11] : memref<1x8x4x32xf32, #tpu.memory_space<vmem>>, vector<1x8x4x32xf32>
    %19 = vector.shape_cast %18 : vector<1x8x4x32xf32> to vector<8x4x32xf32>
    %20 = vector.shape_cast %17 : vector<8x4x32xf32> to vector<1x8x4x32xf32>
    tpu.vector_store %arg5[%c0_8, %c0_9, %c0_10, %c0_11], %20 {strides = array<i32>} : memref<1x8x4x32xf32, #tpu.memory_space<vmem>>, vector<1x8x4x32xf32>,
    return
  }
  func.func @transform_0(%arg0: i32, %arg1: i32) -> (i32, i32, i32) {
    %c0_i32 = arith.constant 0 : i32
    %c0_i32_0 = arith.constant 0 : i32
    return %arg0, %arg1, %c0_i32 : i32, i32, i32
  }
  func.func @transform_1(%arg0: i32, %arg1: i32) -> (i32, i32) {
    %c0_i32 = arith.constant 0 : i32
    %c0_i32_0 = arith.constant 0 : i32
    %c0_i32_1 = arith.constant 0 : i32
    return %c0_i32, %c0_i32_0 : i32, i32
  }
  func.func @transform_2(%arg0: i32, %arg1: i32) -> (i32, i32, i32, i32) {
    %c0_i32 = arith.constant 0 : i32
    %c0_i32_0 = arith.constant 0 : i32
    %c0_i32_1 = arith.constant 0 : i32
    return %arg0, %arg1, %c0_i32, %c0_i32_0 : i32, i32, i32, i32
  }
  func.func @transform_3(%arg0: i32, %arg1: i32) -> (i32, i32, i32, i32) {
    %c0_i32 = arith.constant 0 : i32
    %c0_i32_0 = arith.constant 0 : i32
    %c0_i32_1 = arith.constant 0 : i32
    return %arg0, %arg1, %c0_i32, %c0_i32_0 : i32, i32, i32, i32
  }
}

</mosaic_0001>

<llo_original>
// kernel: tpu_custom_call.1
$region0: #{tpu_custom_call.1}
  #allocation0 [shape = 'u32[]', space=smem, size = 0x4, offset = 0x4, fixed_abs, tag = 'smem constant byte address 0x4 - core index']
  #allocation1 [shape = 'u32[144,128]{1,0:T(1,128)}', space=vmem, size = 0x12000, scoped, tag = 'internal scratch']
  %s0 = inlined_call_operand.vmem [shape: f32[2,8,1], index: 0, kind: input, shape index: {}]
  %s1 = inlined_call_operand.vmem [shape: f32[1,32], index: 1, kind: input, shape index: {}]
  %s2 = inlined_call_operand.hbm [shape: f32[2,8,4,32], index: 2, kind: input, shape index: {}]
  %s3 = inlined_call_operand.hbm [shape: f32[2,8,4,32], index: 3, kind: output, shape index: {}]
  %s4 = sld [smem:[#allocation0]]
  $region49: #{tpu_custom_call.1} parent=0
    _
  %s6 = ssub.s32 1, %s4
  %s7 = scalar_select 0, %s6, %s4
  $region1: #{tpu_custom_call.1} parent=0
    #allocation2 [shape = 'u8[32768]{0}', space=vmem, size = 0x8000, scoped, tag = 'input window, operand 2']
    #allocation3 [shape = 's32[2]{0}', space=sflag, size = 0x8, scoped, tag = 'scoped memory for tpu_custom_call.1']
    #allocation4 [shape = 's32[2]{0}', space=sflag, size = 0x8, scoped, tag = 'scoped memory for tpu_custom_call.1']
    #allocation5 [shape = 'u8[32768]{0}', space=vmem, size = 0x8000, scoped, tag = 'output window, operand 0']
    %8 = vsyncpa [#allocation3], 0
    %s9 = scalar_lea.sflag [#allocation3], 1
    %10 = vsyncpa %s9, 0
    %11 = vsyncpa [#allocation4], 0
    %s12 = scalar_lea.sflag [#allocation4], 1
    %13 = vsyncpa %s12, 0
    loop: start=0, step=1, limit=4
    $region2: #{tpu_custom_call.1} parent=1 // loop_pre_header
      _
    $region3: #{tpu_custom_call.1} parent=1 // loop_header
      %s15 = sphi 0, %s19
      %p16 = scmp.ge.s32.totalorder %s15, 4
      %s22 = sphi 0, %s34
      %s23 = sphi 0, %s30
      %s24 = sphi 0, %s22
      %s25 = sphi 0, %s23
      %s26 = sphi 0, %s24
      %s27 = sphi 0, %s25
      %s39 = sphi 0, %s41
      %s42 = sphi 0, %s39
      %s43 = sphi 0, %s42
      %s59 = sphi 0, %s43
      %s63 = sphi 0, %s63
      %s65 = sphi 0, %s63
      %s66 = sphi 0, %s65
      %s80 = sphi 0, %s66
      %s88 = sphi 0, %s90
      %s91 = sphi 0, %s88
      %s92 = sphi 0, %s91
      %s108 = sphi 0, %s92
      %s116 = sphi 0, %s118
      %s119 = sphi 0, %s116
      %s120 = sphi 0, %s119
      %s136 = sphi 0, %s120
    $region4: #{tpu_custom_call.1} parent=1 // loop_header_branch
      %18 = sbr.rel (%p16) target = $region8
    $region5: #{tpu_custom_call.1} parent=1 // loop_body
      %s20 = ssub.s32 %s15, 1
      %s21 = ssub.s32 %s15, 2
      %s28 = sadd.s32 1, %s23
      %p29 = scmp.ge.s32.totalorder %s28, 1
      %s30 = scalar_select %p29, 0, %s28
      %s31 = sadd.s32 1, %s22
      %s32 = scalar_select %p29, %s31, %s22
      %p33 = scmp.ge.s32.totalorder %s32, 2
      %s34 = scalar_select %p33, 0, %s32
      %s35 = ssub.s32 %s22, %s34
      %s36 = ssub.s32 %s23, %s30
      %s37 = sor.u32 %s35, %s36
      %p38 = scmp.eq.s32.totalorder %s37, 0
      %s40 = sadd.s32 %s39, 1
      %s41 = scalar_select %p38, %s39, %s40
      %p44 = pneg %p38
      %p45 = scmp.eq.s32.totalorder %s15, 1
      %p46 = por %p44, %p45
      %p47 = scmp.ne.s32.totalorder %s39, %s42
      %p48 = scmp.eq.s32.totalorder %s15, 0
      %p49 = por %p47, %p48
      %p50 = scmp.ne.s32.totalorder %s39, %s42
      %p51 = scmp.eq.s32.totalorder %s20, 1
      %p52 = por %p50, %p51
      %p53 = scmp.ne.s32.totalorder %s42, %s43
      %p54 = scmp.eq.s32.totalorder %s20, 0
      %p55 = por %p53, %p54
      %p56 = scmp.ne.s32.totalorder %s42, %s43
      %p57 = scmp.eq.s32.totalorder %s21, 1
      %p58 = por %p56, %p57
      %p60 = scmp.ne.s32.totalorder %s43, %s59
      %p61 = scmp.eq.s32.totalorder %s21, 0
      %p62 = por %p60, %p61
      %s64 = sadd.s32 %s63, 1
      %p67 = scmp.eq.s32.totalorder %s15, 1
      %p68 = scmp.ne.s32.totalorder %s63, %s65
      %p69 = scmp.eq.s32.totalorder %s15, 0
      %p70 = por %p68, %p69
      %p71 = scmp.ne.s32.totalorder %s63, %s65
      %p72 = scmp.eq.s32.totalorder %s20, 1
      %p73 = por %p71, %p72
      %p74 = scmp.ne.s32.totalorder %s65, %s66
      %p75 = scmp.eq.s32.totalorder %s20, 0
      %p76 = por %p74, %p75
      %p77 = scmp.ne.s32.totalorder %s65, %s66
      %p78 = scmp.eq.s32.totalorder %s21, 1
      %p79 = por %p77, %p78
      %p81 = scmp.ne.s32.totalorder %s66, %s80
      %p82 = scmp.eq.s32.totalorder %s21, 0
      %p83 = por %p81, %p82
      %s84 = ssub.s32 %s22, %s34
      %s85 = ssub.s32 %s23, %s30
      %s86 = sor.u32 %s84, %s85
      %p87 = scmp.eq.s32.totalorder %s86, 0
      %s89 = sadd.s32 %s88, 1
      %s90 = scalar_select %p87, %s88, %s89
      %p93 = pneg %p87
      %p94 = scmp.eq.s32.totalorder %s15, 1
      %p95 = por %p93, %p94
      %p96 = scmp.ne.s32.totalorder %s88, %s91
      %p97 = scmp.eq.s32.totalorder %s15, 0
      %p98 = por %p96, %p97
      %p99 = scmp.ne.s32.totalorder %s88, %s91
      %p100 = scmp.eq.s32.totalorder %s20, 1
      %p101 = por %p99, %p100
      %p102 = scmp.ne.s32.totalorder %s91, %s92
      %p103 = scmp.eq.s32.totalorder %s20, 0
      %p104 = por %p102, %p103
      %p105 = scmp.ne.s32.totalorder %s91, %s92
      %p106 = scmp.eq.s32.totalorder %s21, 1
      %p107 = por %p105, %p106
      %p109 = scmp.ne.s32.totalorder %s92, %s108
      %p110 = scmp.eq.s32.totalorder %s21, 0
      %p111 = por %p109, %p110
      %s112 = ssub.s32 %s22, %s34
      %s113 = ssub.s32 %s23, %s30
      %s114 = sor.u32 %s112, %s113
      %p115 = scmp.eq.s32.totalorder %s114, 0
      %s117 = sadd.s32 %s116, 1
      %s118 = scalar_select %p115, %s116, %s117
      %p121 = pneg %p115
      %p122 = scmp.eq.s32.totalorder %s15, 1
      %p123 = por %p121, %p122
      %p124 = scmp.ne.s32.totalorder %s116, %s119
      %p125 = scmp.eq.s32.totalorder %s15, 0
      %p126 = por %p124, %p125
      %p127 = scmp.ne.s32.totalorder %s116, %s119
      %p128 = scmp.eq.s32.totalorder %s20, 1
      %p129 = por %p127, %p128
      %p130 = scmp.ne.s32.totalorder %s119, %s120
      %p131 = scmp.eq.s32.totalorder %s20, 0
      %p132 = por %p130, %p131
      %p133 = scmp.ne.s32.totalorder %s119, %s120
      %p134 = scmp.eq.s32.totalorder %s21, 1
      %p135 = por %p133, %p134
      %p137 = scmp.ne.s32.totalorder %s120, %s136
      %p138 = scmp.eq.s32.totalorder %s21, 0
      %p139 = por %p137, %p138
      %p140 = scmp.le.s32.totalorder 1, %s15
      %p141 = scmp.lt.s32.totalorder %s15, 3
      %p142 = pnand %p140, %p141
      %p143 = pneg %p142
      // Predicated region
      $region9: #{tpu_custom_call.1} parent=5 // pred_check
        _
      $region10: #{tpu_custom_call.1} parent=5 // pred_check_branch
        %145 = sbr.rel (%p142) target = $region12
      $region11: #{tpu_custom_call.1} parent=5 // pred_region
        %s146 = ssub.s32 %s15, 1
        // Predicated region
        $region13: #{tpu_custom_call.1} parent=11 // pred_check
          %p147 = pneg %p76
        $region14: #{tpu_custom_call.1} parent=11 // pred_check_branch
          %149 = sbr.rel (%p147) target = $region16
        $region15: #{tpu_custom_call.1} parent=11 // pred_region
          _
        $region16: #{tpu_custom_call.1} parent=11 // pred_fallthru
          _
      $region12: #{tpu_custom_call.1} parent=5 // pred_fallthru
        _
      %p150 = scmp.lt.s32.totalorder %s15, 2
      // Predicated region
      $region17: #{tpu_custom_call.1} parent=5 // pred_check
        %p151 = pneg %p150
      $region18: #{tpu_custom_call.1} parent=5 // pred_check_branch
        %153 = sbr.rel (%p151) target = $region20
      $region19: #{tpu_custom_call.1} parent=5 // pred_region
        // Predicated region
        $region21: #{tpu_custom_call.1} parent=19 // pred_check
          %p154 = pneg %p49
        $region22: #{tpu_custom_call.1} parent=19 // pred_check_branch
          %156 = sbr.rel (%p154) target = $region24
        $region23: #{tpu_custom_call.1} parent=19 // pred_region
          %p157 = scmp.lt.s32.totalorder %s22, 1
          %s158 = scalar_select %p157, %s22, 1
          %p159 = scmp.lt.s32.totalorder %s23, 0
          %s160 = scalar_select %p159, %s23, 0
          %s161 = sadd.s32 %s160, %s158
          %s162 = smul.addr %s161, 8
          %s163 = scalar_lea.vmem %s0, %s162
        $region24: #{tpu_custom_call.1} parent=19 // pred_fallthru
          _
        // Predicated region
        $region25: #{tpu_custom_call.1} parent=19 // pred_check
          %p164 = pneg %p98
        $region26: #{tpu_custom_call.1} parent=19 // pred_check_branch
          %166 = sbr.rel (%p164) target = $region28
        $region27: #{tpu_custom_call.1} parent=19 // pred_region
          %s167 = sand.u32 %s88, 1
          %s168 = scalar_lea.sflag [#allocation3], %s167
          %s169 = sand.u32 %s88, 1
          %s170 = smul.addr %s169, 32
          %s171 = scalar_lea.vmem [#allocation2], %s170
          %s172 = smul.u32 8, %s23
          %s174 = ssub.s32 512, 512
          %175 = vsyncadd %s168, %s174
          %s176 = smul.addr %s22, 8
          %s177 = sadd.s32 %s172, %s176
          %s178 = smul.addr %s177, 64
          %s179 = scalar_lea.hbm %s2, %s178
          %s180 = sshll.u32 %s171, 4
          %s181 = int_to_ptr.vmem [resolvable:$true] %s180
          %186 = dma.hbm_to_vmem [thread:$0]  %s179, 512, %s181, %s168, 64, 64, 4
        $region28: #{tpu_custom_call.1} parent=19 // pred_fallthru
          _
      $region20: #{tpu_custom_call.1} parent=5 // pred_fallthru
        _
      %p187 = scmp.le.s32.totalorder 1, %s15
      %p188 = scmp.lt.s32.totalorder %s15, 3
      %p189 = pnand %p187, %p188
      %p190 = pneg %p189
      // Predicated region
      $region29: #{tpu_custom_call.1} parent=5 // pred_check
        _
      $region30: #{tpu_custom_call.1} parent=5 // pred_check_branch
        %192 = sbr.rel (%p189) target = $region32
      $region31: #{tpu_custom_call.1} parent=5 // pred_region
        %s193 = ssub.s32 %s15, 1
        %s194 = sand.u32 %s91, 1
        %s195 = scalar_lea.sflag [#allocation3], %s194
        %s196 = sand.u32 %s91, 1
        %s197 = smul.addr %s196, 32
        %s198 = scalar_lea.vmem [#allocation2], %s197
        // Predicated region
        $region33: #{tpu_custom_call.1} parent=31 // pred_check
          %p199 = pneg %p104
        $region34: #{tpu_custom_call.1} parent=31 // pred_check_branch
          %201 = sbr.rel (%p199) target = $region36
        $region35: #{tpu_custom_call.1} parent=31 // pred_region
          %202 = dma.done %s195, 512
        $region36: #{tpu_custom_call.1} parent=31 // pred_fallthru
          _
        %p203 = scmp.lt.s32.totalorder %s24, 1
        %s204 = scalar_select %p203, %s24, 1
        %p205 = scmp.lt.s32.totalorder %s25, 0
        %s206 = scalar_select %p205, %s25, 0
        %s207 = sadd.s32 %s206, %s204
        %s208 = smul.addr %s207, 8
        %s209 = scalar_lea.vmem %s0, %s208
        %p210 = pneg %p55
        %p211 = pneg %p52
        %p212 = pneg %p76
        %p213 = pneg %p73
        %s214 = sand.u32 %s91, 1
        %s215 = scalar_lea.sflag [#allocation3], %s214
        %s216 = sand.u32 %s91, 1
        %s217 = smul.addr %s216, 32
        %s218 = scalar_lea.vmem [#allocation2], %s217
        %p219 = pneg %p104
        %p220 = pneg %p101
        %p221 = pneg %p132
        %p222 = pneg %p129
        %s223 = sand.u32 %s119, 1
        %s224 = scalar_lea.sflag [#allocation4], %s223
        %s225 = sand.u32 %s119, 1
        %s226 = smul.addr %s225, 32
        %s227 = scalar_lea.vmem [#allocation5], %s226
        %p228 = scmp.lt.s32.totalorder %s24, 1
        %s229 = scalar_select %p228, %s24, 1
        %p230 = scmp.lt.s32.totalorder %s25, 0
        %s231 = scalar_select %p230, %s25, 0
        %s232 = sadd.s32 %s231, %s229
        %s233 = smul.addr %s232, 8
        %s234 = scalar_lea.vmem %s0, %s233
        %s235 = smul.u32 8, %s25
        %s236 = smul.u32 8, %s25
        %v237 = vld [vmem:[%s234] sm:$0xff]
        %v238 = vld [vmem:[%s1] sm:$0x1]
        %240 = vset.pattern.permute.xlu0 0
        %241 = vperm.xlu0 %240, %v237
        %v242 = vpop.permute.xlu0 %241
        %v245 = vlaneseq
        %v246 = vshrl.u32 %v245, 7
        %v247 = vsub.s32 0, %v246
        %v248 = vrot.slane %v238, %v247
        %v250 = vmul.f32 %v242, %v248
        %v251 = vand.u32 2147483647, %v250
        %vm252 = vcmp.le.f32.partialorder %v251, 0.7853982
        %vm253 = vcmp.lt.s32.totalorder %v250, 0
        %v254 = vand.u32 %v250, 2139095040
        %v255 = vshrl.u32 %v254, 23
        %v256 = vsub.s32 %v255, 127
        %v257 = vand.u32 2147483647, %v250
        %v258 = vand.u32 %v257, 8388607
        %v259 = vor.u32 %v258, 8388608
        %v260 = vsub.s32 0, %v259
        %v261 = vadd.s32 %v256, 1
        %vm262 = vcmp.gt.s32.totalorder %v261, 0
        %v263 = vsel %vm262, %v261, 0
        %v264 = vshrl.u32 %v263, 5
        %v265 = vand.u32 %v263, 31
        %v266 = vsub.s32 32, %v265
        %v267 = vshrl.u32 683565275, %v266
        %v268 = vshll.u32 683565275, %v265
        %v269 = vshrl.u32 2475754826, %v266
        %v270 = vor.u32 %v268, %v269
        %v271 = vshll.u32 2475754826, %v265
        %v272 = vshrl.u32 2131351028, %v266
        %v273 = vor.u32 %v271, %v272
        %v274 = vshll.u32 2131351028, %v265
        %v275 = vshrl.u32 2102212464, %v266
        %v276 = vor.u32 %v274, %v275
        %v277 = vshll.u32 2102212464, %v265
        %v278 = vshrl.u32 920167782, %v266
        %v279 = vor.u32 %v277, %v278
        %v280 = vshll.u32 920167782, %v265
        %v281 = vshrl.u32 1326507024, %v266
        %v282 = vor.u32 %v280, %v281
        %vm283 = vcmp.lt.s32.totalorder %v264, 1
        %vm284 = vcmp.lt.s32.totalorder %v264, 2
        %vm285 = vcmp.lt.s32.totalorder %v264, 3
        %vm286 = vcmp.lt.s32.totalorder %v264, 4
        %v287 = vsel %vm283, %v267, %v270
        %v288 = vsel %vm286, %v276, 2102212464
        %v289 = vsel %vm285, %v273, %v288
        %v290 = vsel %vm284, %v287, %v289
        %v291 = vsel %vm283, %v270, %v273
        %v292 = vsel %vm286, %v279, 920167782
        %v293 = vsel %vm285, %v276, %v292
        %v294 = vsel %vm284, %v291, %v293
        %v295 = vsel %vm283, %v273, %v276
        %v296 = vsel %vm286, %v282, 1326507024
        %v297 = vsel %vm285, %v279, %v296
        %v298 = vsel %vm284, %v295, %v297
        %v299 = vshll.u32 %v259, 8
        %v300 = vmul.u32.u64.compose %v299, %v298
        %v301 = vextract.low.u32 %v300
        %v302 = vextract.high.u32 %v300
        %v303 = vmul.u32.u64.compose %v299, %v294
        %v304 = vextract.low.u32 %v303
        %v305 = vextract.high.u32 %v303
        %v306 = vmul.u32 %v299, %v290
        %v307 = vadd.s32 %v302, %v304
        %vm308 = vc.u32 %v302, %v304
        %v309 = vadd.s32 %v305, 1
        %v310 = vsel %vm308, %v309, %v305
        %v311 = vadd.s32 %v306, %v310
        %v312 = vadd.s32 %v311, 536870912
        %v313 = vshrl.u32 %v312, 30
        %v314 = vshll.u32 %v313, 30
        %v315 = vsub.s32 %v311, %v314
        %vm316 = vcmp.lt.s32.totalorder %v315, 0
        %v317 = vsub.s32 0, %v315
        %v318 = vsel %vm316, %v317, %v315
        %v319 = vclz %v318
        %v320 = vsub.s32 %v319, 2
        %vm321 = vcmp.gt.s32.totalorder 0, %v320
        %v322 = vsel %vm321, 0, %v320
        %v323 = vsub.s32 32, %v322
        %v324 = vshll.u32 %v315, %v322
        %v325 = vshrl.u32 %v307, %v323
        %v326 = vor.u32 %v324, %v325
        %v327 = vsub.s32 4294967266, %v322
        %v328 = vadd.s32 %v327, 127
        %v329 = vshll.u32 %v328, 23
        %v330 = vor.u32 4788187, %v329
        %v331 = vand.u32 2147483647, %v330
        %v333 = vcvt.s32.f32 %v326
        %v334 = vmul.f32 %v333, %v331
        %v335 = vxor.u32 %v334, 2147483648
        %v336 = vsel %vm253, %v335, %v334
        %v337 = vsub.s32 4, %v313
        %v338 = vsel %vm253, %v337, %v313
        %v339 = vsel %vm252, %v250, %v336
        %v340 = vsel %vm252, 0, %v338
        %v341 = vcosq.f32.pop %v339
        %v342 = vsinq.f32.pop %v339
        %vm343 = vweird.f32 %v250
        %v344 = vadd.s32 %v340, 3
        %v345 = vand.u32 %v344, 3
        %vm346 = vcmp.lt.s32.totalorder %v345, 2
        %vm347 = vcmp.eq.s32.totalorder %v345, 0
        %v348 = vxor.u32 %v342, 2147483648
        %v349 = vsel %vm347, %v341, %v348
        %vm350 = vcmp.eq.s32.totalorder %v345, 2
        %v351 = vxor.u32 %v341, 2147483648
        %v352 = vsel %vm350, %v351, %v342
        %v353 = vsel %vm346, %v349, %v352
        %v354 = vsel %vm343, nan, %v353
        %v355 = vand.u32 2147483647, %v250
        %vm356 = vcmp.le.f32.partialorder %v355, 0.7853982
        %vm357 = vcmp.lt.s32.totalorder %v250, 0
        %v358 = vand.u32 %v250, 2139095040
        %v359 = vshrl.u32 %v358, 23
        %v360 = vsub.s32 %v359, 127
        %v361 = vand.u32 2147483647, %v250
        %v362 = vand.u32 %v361, 8388607
        %v363 = vor.u32 %v362, 8388608
        %v364 = vsub.s32 0, %v363
        %v365 = vadd.s32 %v360, 1
        %vm366 = vcmp.gt.s32.totalorder %v365, 0
        %v367 = vsel %vm366, %v365, 0
        %v368 = vshrl.u32 %v367, 5
        %v369 = vand.u32 %v367, 31
        %v370 = vsub.s32 32, %v369
        %v371 = vshrl.u32 683565275, %v370
        %v372 = vshll.u32 683565275, %v369
        %v373 = vshrl.u32 2475754826, %v370
        %v374 = vor.u32 %v372, %v373
        %v375 = vshll.u32 2475754826, %v369
        %v376 = vshrl.u32 2131351028, %v370
        %v377 = vor.u32 %v375, %v376
        %v378 = vshll.u32 2131351028, %v369
        %v379 = vshrl.u32 2102212464, %v370
        %v380 = vor.u32 %v378, %v379
        %v381 = vshll.u32 2102212464, %v369
        %v382 = vshrl.u32 920167782, %v370
        %v383 = vor.u32 %v381, %v382
        %v384 = vshll.u32 920167782, %v369
        %v385 = vshrl.u32 1326507024, %v370
        %v386 = vor.u32 %v384, %v385
        %vm387 = vcmp.lt.s32.totalorder %v368, 1
        %vm388 = vcmp.lt.s32.totalorder %v368, 2
        %vm389 = vcmp.lt.s32.totalorder %v368, 3
        %vm390 = vcmp.lt.s32.totalorder %v368, 4
        %v391 = vsel %vm387, %v371, %v374
        %v392 = vsel %vm390, %v380, 2102212464
        %v393 = vsel %vm389, %v377, %v392
        %v394 = vsel %vm388, %v391, %v393
        %v395 = vsel %vm387, %v374, %v377
        %v396 = vsel %vm390, %v383, 920167782
        %v397 = vsel %vm389, %v380, %v396
        %v398 = vsel %vm388, %v395, %v397
        %v399 = vsel %vm387, %v377, %v380
        %v400 = vsel %vm390, %v386, 1326507024
        %v401 = vsel %vm389, %v383, %v400
        %v402 = vsel %vm388, %v399, %v401
        %v403 = vshll.u32 %v363, 8
        %v404 = vmul.u32.u64.compose %v403, %v402
        %v405 = vextract.low.u32 %v404
        %v406 = vextract.high.u32 %v404
        %v407 = vmul.u32.u64.compose %v403, %v398
        %v408 = vextract.low.u32 %v407
        %v409 = vextract.high.u32 %v407
        %v410 = vmul.u32 %v403, %v394
        %v411 = vadd.s32 %v406, %v408
        %vm412 = vc.u32 %v406, %v408
        %v413 = vadd.s32 %v409, 1
        %v414 = vsel %vm412, %v413, %v409
        %v415 = vadd.s32 %v410, %v414
        %v416 = vadd.s32 %v415, 536870912
        %v417 = vshrl.u32 %v416, 30
        %v418 = vshll.u32 %v417, 30
        %v419 = vsub.s32 %v415, %v418
        %vm420 = vcmp.lt.s32.totalorder %v419, 0
        %v421 = vsub.s32 0, %v419
        %v422 = vsel %vm420, %v421, %v419
        %v423 = vclz %v422
        %v424 = vsub.s32 %v423, 2
        %vm425 = vcmp.gt.s32.totalorder 0, %v424
        %v426 = vsel %vm425, 0, %v424
        %v427 = vsub.s32 32, %v426
        %v428 = vshll.u32 %v419, %v426
        %v429 = vshrl.u32 %v411, %v427
        %v430 = vor.u32 %v428, %v429
        %v431 = vsub.s32 4294967266, %v426
        %v432 = vadd.s32 %v431, 127
        %v433 = vshll.u32 %v432, 23
        %v434 = vor.u32 4788187, %v433
        %v435 = vand.u32 2147483647, %v434
        %v437 = vcvt.s32.f32 %v430
        %v438 = vmul.f32 %v437, %v435
        %v439 = vxor.u32 %v438, 2147483648
        %v440 = vsel %vm357, %v439, %v438
        %v441 = vsub.s32 4, %v417
        %v442 = vsel %vm357, %v441, %v417
        %v443 = vsel %vm356, %v250, %v440
        %v444 = vsel %vm356, 0, %v442
        %v445 = vcosq.f32.pop %v443
        %v446 = vsinq.f32.pop %v443
        %vm447 = vweird.f32 %v250
        %v448 = vand.u32 %v444, 3
        %vm449 = vcmp.lt.s32.totalorder %v448, 2
        %vm450 = vcmp.eq.s32.totalorder %v448, 0
        %v451 = vxor.u32 %v446, 2147483648
        %v452 = vsel %vm450, %v445, %v451
        %vm453 = vcmp.eq.s32.totalorder %v448, 2
        %v454 = vxor.u32 %v445, 2147483648
        %v455 = vsel %vm453, %v454, %v446
        %v456 = vsel %vm449, %v452, %v455
        %v457 = vsel %vm447, nan, %v456
        %v458 = vld [vmem:[%s198] sm:$0xf]
        %v459 = vld [vmem:[%s198 + $0x4] sm:$0xf]
        %v460 = vld [vmem:[%s198 + $0x8] sm:$0xf]
        %v461 = vld [vmem:[%s198 + $0xc] sm:$0xf]
        %v462 = vld [vmem:[%s198 + $0x10] sm:$0xf]
        %v463 = vld [vmem:[%s198 + $0x14] sm:$0xf]
        %v464 = vld [vmem:[%s198 + $0x18] sm:$0xf]
        %v465 = vld [vmem:[%s198 + $0x1c] sm:$0xf]
        %vm466 = vcmask 1047808
        %467 = vrot.lane.b32.xlu0 %v458, 32
        %v468 = vpop.permute.xlu0 %467
        %v469 = vsel %vm466, %v468, %v458
        %470 = vrot.lane.b32.xlu0 %v459, 32
        %v471 = vpop.permute.xlu0 %470
        %v472 = vsel %vm466, %v471, %v459
        %473 = vrot.lane.b32.xlu0 %v460, 32
        %v474 = vpop.permute.xlu0 %473
        %v475 = vsel %vm466, %v474, %v460
        %476 = vrot.lane.b32.xlu0 %v461, 32
        %v477 = vpop.permute.xlu0 %476
        %v478 = vsel %vm466, %v477, %v461
        %479 = vrot.lane.b32.xlu0 %v462, 32
        %v480 = vpop.permute.xlu0 %479
        %v481 = vsel %vm466, %v480, %v462
        %482 = vrot.lane.b32.xlu0 %v463, 32
        %v483 = vpop.permute.xlu0 %482
        %v484 = vsel %vm466, %v483, %v463
        %485 = vrot.lane.b32.xlu0 %v464, 32
        %v486 = vpop.permute.xlu0 %485
        %v487 = vsel %vm466, %v486, %v464
        %488 = vrot.lane.b32.xlu0 %v465, 32
        %v489 = vpop.permute.xlu0 %488
        %v490 = vsel %vm466, %v489, %v465
        %491 = vrot.lane.b32.xlu0 %v469, 32
        %v492 = vpop.permute.xlu0 %491
        %493 = vrot.lane.b32.xlu0 %v472, 32
        %v494 = vpop.permute.xlu0 %493
        %495 = vrot.lane.b32.xlu0 %v475, 32
        %v496 = vpop.permute.xlu0 %495
        %497 = vrot.lane.b32.xlu0 %v478, 32
        %v498 = vpop.permute.xlu0 %497
        %499 = vrot.lane.b32.xlu0 %v481, 32
        %v500 = vpop.permute.xlu0 %499
        %501 = vrot.lane.b32.xlu0 %v484, 32
        %v502 = vpop.permute.xlu0 %501
        %503 = vrot.lane.b32.xlu0 %v487, 32
        %v504 = vpop.permute.xlu0 %503
        %505 = vrot.lane.b32.xlu0 %v490, 32
        %v506 = vpop.permute.xlu0 %505
        %v507 = vsel %vm466, %v492, %v458
        %v508 = vsel %vm466, %v494, %v459
        %v509 = vsel %vm466, %v496, %v460
        %v510 = vsel %vm466, %v498, %v461
        %v511 = vsel %vm466, %v500, %v462
        %v512 = vsel %vm466, %v502, %v463
        %v513 = vsel %vm466, %v504, %v464
        %v514 = vsel %vm466, %v506, %v465
        %v516 = vcombine.high %v457, %v457
        %v518 = vunpack.c.l.s4 1966171168
        %v519 = vunpack.c.0.s8 %v518
        %v520 = vlaneseq
        %v521 = vshrl.u32 %v520, 7
        %v522 = vsub.s32 %v519, %v521
        %v523 = vrot.slane %v457, %v522
        %v525 = vunpack.c.l.s4 1966171168
        %v526 = vunpack.c.0.s8 %v525
        %v527 = vlaneseq
        %v528 = vshrl.u32 %v527, 7
        %v529 = vsub.s32 %v526, %v528
        %v530 = vrot.slane %v516, %v529
        %v531 = vcombine.high %v523, %v523
        %v532 = vcombine.high %v530, %v530
        %v534 = vunpack.c.l.s4 1966171168
        %v535 = vunpack.c.0.s8 %v534
        %v536 = vlaneseq
        %v537 = vshrl.u32 %v536, 7
        %v538 = vsub.s32 %v535, %v537
        %v539 = vrot.slane %v523, %v538
        %v541 = vunpack.c.l.s4 1966171168
        %v542 = vunpack.c.0.s8 %v541
        %v543 = vlaneseq
        %v544 = vshrl.u32 %v543, 7
        %v545 = vsub.s32 %v542, %v544
        %v546 = vrot.slane %v530, %v545
        %v548 = vunpack.c.l.s4 1966171168
        %v549 = vunpack.c.0.s8 %v548
        %v550 = vlaneseq
        %v551 = vshrl.u32 %v550, 7
        %v552 = vsub.s32 %v549, %v551
        %v553 = vrot.slane %v531, %v552
        %v555 = vunpack.c.l.s4 1966171168
        %v556 = vunpack.c.0.s8 %v555
        %v557 = vlaneseq
        %v558 = vshrl.u32 %v557, 7
        %v559 = vsub.s32 %v556, %v558
        %v560 = vrot.slane %v532, %v559
        %v561 = vcombine.high %v539, %v539
        %v562 = vcombine.high %v546, %v546
        %v563 = vcombine.high %v553, %v553
        %v564 = vcombine.high %v560, %v560
        %v565 = vlaneseq
        %v566 = vshrl.u32 %v565, 7
        %v567 = vsub.s32 0, %v566
        %v568 = vrot.slane %v539, %v567
        %v569 = vlaneseq
        %v570 = vshrl.u32 %v569, 7
        %v571 = vsub.s32 0, %v570
        %v572 = vrot.slane %v553, %v571
        %v573 = vlaneseq
        %v574 = vshrl.u32 %v573, 7
        %v575 = vsub.s32 0, %v574
        %v576 = vrot.slane %v561, %v575
        %v577 = vlaneseq
        %v578 = vshrl.u32 %v577, 7
        %v579 = vsub.s32 0, %v578
        %v580 = vrot.slane %v563, %v579
        %v581 = vlaneseq
        %v582 = vshrl.u32 %v581, 7
        %v583 = vsub.s32 0, %v582
        %v584 = vrot.slane %v546, %v583
        %v585 = vlaneseq
        %v586 = vshrl.u32 %v585, 7
        %v587 = vsub.s32 0, %v586
        %v588 = vrot.slane %v560, %v587
        %v589 = vlaneseq
        %v590 = vshrl.u32 %v589, 7
        %v591 = vsub.s32 0, %v590
        %v592 = vrot.slane %v562, %v591
        %v593 = vlaneseq
        %v594 = vshrl.u32 %v593, 7
        %v595 = vsub.s32 0, %v594
        %v596 = vrot.slane %v564, %v595
        %v605 = vmul.f32 %v458, %v568
        %v606 = vmul.f32 %v459, %v572
        %v607 = vmul.f32 %v460, %v576
        %v608 = vmul.f32 %v461, %v580
        %v609 = vmul.f32 %v462, %v584
        %v610 = vmul.f32 %v463, %v588
        %v611 = vmul.f32 %v464, %v592
        %v612 = vmul.f32 %v465, %v596
        %v614 = vcombine.high %v354, %v354
        %v616 = vunpack.c.l.s4 1966171168
        %v617 = vunpack.c.0.s8 %v616
        %v618 = vlaneseq
        %v619 = vshrl.u32 %v618, 7
        %v620 = vsub.s32 %v617, %v619
        %v621 = vrot.slane %v354, %v620
        %v623 = vunpack.c.l.s4 1966171168
        %v624 = vunpack.c.0.s8 %v623
        %v625 = vlaneseq
        %v626 = vshrl.u32 %v625, 7
        %v627 = vsub.s32 %v624, %v626
        %v628 = vrot.slane %v614, %v627
        %v629 = vcombine.high %v621, %v621
        %v630 = vcombine.high %v628, %v628
        %v632 = vunpack.c.l.s4 1966171168
        %v633 = vunpack.c.0.s8 %v632
        %v634 = vlaneseq
        %v635 = vshrl.u32 %v634, 7
        %v636 = vsub.s32 %v633, %v635
        %v637 = vrot.slane %v621, %v636
        %v639 = vunpack.c.l.s4 1966171168
        %v640 = vunpack.c.0.s8 %v639
        %v641 = vlaneseq
        %v642 = vshrl.u32 %v641, 7
        %v643 = vsub.s32 %v640, %v642
        %v644 = vrot.slane %v628, %v643
        %v646 = vunpack.c.l.s4 1966171168
        %v647 = vunpack.c.0.s8 %v646
        %v648 = vlaneseq
        %v649 = vshrl.u32 %v648, 7
        %v650 = vsub.s32 %v647, %v649
        %v651 = vrot.slane %v629, %v650
        %v653 = vunpack.c.l.s4 1966171168
        %v654 = vunpack.c.0.s8 %v653
        %v655 = vlaneseq
        %v656 = vshrl.u32 %v655, 7
        %v657 = vsub.s32 %v654, %v656
        %v658 = vrot.slane %v630, %v657
        %v659 = vcombine.high %v637, %v637
        %v660 = vcombine.high %v644, %v644
        %v661 = vcombine.high %v651, %v651
        %v662 = vcombine.high %v658, %v658
        %v663 = vlaneseq
        %v664 = vshrl.u32 %v663, 7
        %v665 = vsub.s32 0, %v664
        %v666 = vrot.slane %v637, %v665
        %v667 = vlaneseq
        %v668 = vshrl.u32 %v667, 7
        %v669 = vsub.s32 0, %v668
        %v670 = vrot.slane %v651, %v669
        %v671 = vlaneseq
        %v672 = vshrl.u32 %v671, 7
        %v673 = vsub.s32 0, %v672
        %v674 = vrot.slane %v659, %v673
        %v675 = vlaneseq
        %v676 = vshrl.u32 %v675, 7
        %v677 = vsub.s32 0, %v676
        %v678 = vrot.slane %v661, %v677
        %v679 = vlaneseq
        %v680 = vshrl.u32 %v679, 7
        %v681 = vsub.s32 0, %v680
        %v682 = vrot.slane %v644, %v681
        %v683 = vlaneseq
        %v684 = vshrl.u32 %v683, 7
        %v685 = vsub.s32 0, %v684
        %v686 = vrot.slane %v658, %v685
        %v687 = vlaneseq
        %v688 = vshrl.u32 %v687, 7
        %v689 = vsub.s32 0, %v688
        %v690 = vrot.slane %v660, %v689
        %v691 = vlaneseq
        %v692 = vshrl.u32 %v691, 7
        %v693 = vsub.s32 0, %v692
        %v694 = vrot.slane %v662, %v693
        %695 = vrot.lane.b32.xlu0 %v666, 16
        %v696 = vpop.permute.xlu0 %695
        %697 = vrot.lane.b32.xlu0 %v670, 16
        %v698 = vpop.permute.xlu0 %697
        %699 = vrot.lane.b32.xlu0 %v674, 16
        %v700 = vpop.permute.xlu0 %699
        %701 = vrot.lane.b32.xlu0 %v678, 16
        %v702 = vpop.permute.xlu0 %701
        %703 = vrot.lane.b32.xlu0 %v682, 16
        %v704 = vpop.permute.xlu0 %703
        %705 = vrot.lane.b32.xlu0 %v686, 16
        %v706 = vpop.permute.xlu0 %705
        %707 = vrot.lane.b32.xlu0 %v690, 16
        %v708 = vpop.permute.xlu0 %707
        %709 = vrot.lane.b32.xlu0 %v694, 16
        %v710 = vpop.permute.xlu0 %709
        %v719 = vmul.f32 %v507, %v696
        %v720 = vmul.f32 %v508, %v698
        %v721 = vmul.f32 %v509, %v700
        %v722 = vmul.f32 %v510, %v702
        %v723 = vmul.f32 %v511, %v704
        %v724 = vmul.f32 %v512, %v706
        %v725 = vmul.f32 %v513, %v708
        %v726 = vmul.f32 %v514, %v710
        %735 = vrot.lane.b32.xlu0 %v719, 112
        %v736 = vpop.permute.xlu0 %735
        %737 = vrot.lane.b32.xlu0 %v720, 112
        %v738 = vpop.permute.xlu0 %737
        %739 = vrot.lane.b32.xlu0 %v721, 112
        %v740 = vpop.permute.xlu0 %739
        %741 = vrot.lane.b32.xlu0 %v722, 112
        %v742 = vpop.permute.xlu0 %741
        %743 = vrot.lane.b32.xlu0 %v723, 112
        %v744 = vpop.permute.xlu0 %743
        %745 = vrot.lane.b32.xlu0 %v724, 112
        %v746 = vpop.permute.xlu0 %745
        %747 = vrot.lane.b32.xlu0 %v725, 112
        %v748 = vpop.permute.xlu0 %747
        %749 = vrot.lane.b32.xlu0 %v726, 112
        %v750 = vpop.permute.xlu0 %749
        %v759 = vadd.f32 %v605, %v736
        %v760 = vadd.f32 %v606, %v738
        %v761 = vadd.f32 %v607, %v740
        %v762 = vadd.f32 %v608, %v742
        %v763 = vadd.f32 %v609, %v744
        %v764 = vadd.f32 %v610, %v746
        %v765 = vadd.f32 %v611, %v748
        %v766 = vadd.f32 %v612, %v750
        %vm767 = vcmask 257024
        %768 = vst.msk [vmem:[%s227] sm:$0xf] %vm767, %v759
        %769 = vst.msk [vmem:[%s227 + $0x4] sm:$0xf] %vm767, %v760
        %770 = vst.msk [vmem:[%s227 + $0x8] sm:$0xf] %vm767, %v761
        %771 = vst.msk [vmem:[%s227 + $0xc] sm:$0xf] %vm767, %v762
        %772 = vst.msk [vmem:[%s227 + $0x10] sm:$0xf] %vm767, %v763
        %773 = vst.msk [vmem:[%s227 + $0x14] sm:$0xf] %vm767, %v764
        %774 = vst.msk [vmem:[%s227 + $0x18] sm:$0xf] %vm767, %v765
        %775 = vst.msk [vmem:[%s227 + $0x1c] sm:$0xf] %vm767, %v766
        %s776 = sand.u32 %s119, 1
        %s777 = scalar_lea.sflag [#allocation4], %s776
        %s778 = sand.u32 %s119, 1
        %s779 = smul.addr %s778, 32
        %s780 = scalar_lea.vmem [#allocation5], %s779
        // Predicated region
        $region37: #{tpu_custom_call.1} parent=31 // pred_check
          %p781 = pneg %p129
        $region38: #{tpu_custom_call.1} parent=31 // pred_check_branch
          %783 = sbr.rel (%p781) target = $region40
        $region39: #{tpu_custom_call.1} parent=31 // pred_region
          %s784 = smul.u32 8, %s25
          %s786 = ssub.s32 512, 512
          %787 = vsyncadd %s777, %s786
          %s788 = smul.addr %s24, 8
          %s789 = sadd.s32 %s784, %s788
          %s790 = smul.addr %s789, 64
          %s791 = scalar_lea.hbm %s3, %s790
          %s792 = sshll.u32 %s780, 4
          %s793 = int_to_ptr.vmem [resolvable:$true] %s792
          %798 = dma.vmem_to_hbm [thread:$0]  %s793, 512, %s791, %s777, 64, 64, 4
        $region40: #{tpu_custom_call.1} parent=31 // pred_fallthru
          _
      $region32: #{tpu_custom_call.1} parent=5 // pred_fallthru
        _
      %p799 = scmp.le.s32.totalorder 2, %s15
      // Predicated region
      $region41: #{tpu_custom_call.1} parent=5 // pred_check
        %p800 = pneg %p799
      $region42: #{tpu_custom_call.1} parent=5 // pred_check_branch
        %802 = sbr.rel (%p800) target = $region44
      $region43: #{tpu_custom_call.1} parent=5 // pred_region
        %s803 = ssub.s32 %s15, 2
        // Predicated region
        $region45: #{tpu_custom_call.1} parent=43 // pred_check
          %p804 = pneg %p135
        $region46: #{tpu_custom_call.1} parent=43 // pred_check_branch
          %806 = sbr.rel (%p804) target = $region48
        $region47: #{tpu_custom_call.1} parent=43 // pred_region
          %s807 = sand.u32 %s120, 1
          %s808 = scalar_lea.sflag [#allocation4], %s807
          %s809 = sand.u32 %s120, 1
          %s810 = smul.addr %s809, 32
          %s811 = scalar_lea.vmem [#allocation5], %s810
          %812 = dma.done %s808, 512
        $region48: #{tpu_custom_call.1} parent=43 // pred_fallthru
          _
      $region44: #{tpu_custom_call.1} parent=5 // pred_fallthru
        _
    $region6: #{tpu_custom_call.1} parent=1 // loop_footer
      %s19 = sadd.s32 1, %s15
    $region7: #{tpu_custom_call.1} parent=1 // loop_footer_branch
      %14 = sbr.rel target = $region3
    $region8: #{tpu_custom_call.1} parent=1 // loop_exit
      _
    %813 = vsyncpa [#allocation3], 1
    %s814 = scalar_lea.sflag [#allocation3], 1
    %815 = vsyncpa %s814, 1
    %816 = vsyncpa [#allocation4], 1
    %s817 = scalar_lea.sflag [#allocation4], 1
    %818 = vsyncpa %s817, 1

</llo_original>
